<compile_context>
chip_gen: v7x
topology: tpu7x:2x2x1
jax: 0.10.0
libtpu: 0.0.40
codegen_flags: <defaults>
</compile_context>

<pallas_src>
import jax
import jax.numpy as jnp
from jax.experimental import pallas as pl
from jax.experimental.pallas import tpu as pltpu


def attn_kernel(x_ref, w1_ref, b1_ref, w2_ref, o_ref):
    """Fused attention-score kernel.

    x_ref : (B*S, H) f32 VMEM  flattened encoder outputs
    w1_ref: (H, A)   f32 VMEM  first Linear weight (stored transposed)
    b1_ref: (1, A)   f32 VMEM  first Linear bias
    w2_ref: (1, A)   f32 VMEM  second Linear weight as a row
    o_ref : (B, S)   f32 VMEM  softmax over S; S sits on the lane axis

    The second Linear's scalar bias is intentionally omitted: softmax over S
    is invariant to adding the same scalar to every logit of a row.
    """
    B, S = o_ref.shape

    # Linear(H, A) + ReLU: one MXU matmul over all B*S rows at once.
    h = jnp.dot(x_ref[...], w1_ref[...], preferred_element_type=jnp.float32)
    h = jnp.maximum(h + b1_ref[...], 0.0)                       # (B*S, A)

    # Linear(A, 1) as VPU multiply + lane reduction (no N=1 matmul, no
    # lane-sparse (B*S, 1) intermediate).  The reshape only splits the
    # sublane dim (S divides into whole sublane groups), so it is layout-cheap.
    h3 = h.reshape(B, S, -1)                                    # (B, S, A)
    e = jnp.sum(h3 * w2_ref[...], axis=-1)                      # (B, S)

    # Softmax over the sequence axis (lane axis of the (B, S) tile).
    m = jnp.max(e, axis=-1, keepdims=True)
    p = jnp.exp(e - m)
    denom = jnp.sum(p, axis=-1, keepdims=True)
    o_ref[...] = p / denom


def attn_forward(x, w1, b1, w2_row, b2=None):
    """x: (B, S, H) f32.  Returns (B, S, 1) f32 attention weights.

    `b2` (second Linear's scalar bias) is accepted for interface parity with
    the PyTorch module but not used: it is softmax-shift-invariant.
    """
    del b2  # mathematically a no-op for the softmax output
    B, S, H = x.shape
    x_flat = x.reshape(B * S, H)   # contiguous, free in XLA

    out2d = pl.pallas_call(
        attn_kernel,
        out_shape=jax.ShapeDtypeStruct((B, S), jnp.float32),
        in_specs=[
            pl.BlockSpec(memory_space=pltpu.MemorySpace.VMEM),   # x_flat (B*S, H)
            pl.BlockSpec(memory_space=pltpu.MemorySpace.VMEM),   # w1 (H, A)
            pl.BlockSpec(memory_space=pltpu.MemorySpace.VMEM),   # b1 (1, A)
            pl.BlockSpec(memory_space=pltpu.MemorySpace.VMEM),   # w2 row (1, A)
        ],
        out_specs=pl.BlockSpec(memory_space=pltpu.MemorySpace.VMEM),
    )(x_flat, w1, b1, w2_row)

    # unsqueeze(2) in the wrapper so the kernel's store stays lane-dense.
    return out2d[..., None]


def attn_reference(x, w1, b1, w2_row, b2):
    """Pure-JAX reference that DOES include b2, to show exact equivalence."""
    B, S, H = x.shape
    tmp = x.reshape(-1, H)
    h = jnp.maximum(tmp @ w1 + b1, 0.0)
    e = (h @ w2_row.T + b2).reshape(B, S)
    return jax.nn.softmax(e, axis=1)[..., None]


if __name__ == "__main__":
    # Shapes consistent with the module: B=2, S=8, h_dim=32, attn_num=16
    B, S, H, A = 2, 8, 32, 16

    key = jax.random.PRNGKey(0)
    kx, kw1, kb1, kw2, kb2 = jax.random.split(key, 5)

    x = jax.random.normal(kx, (B, S, H), dtype=jnp.float32)

    # nn.Linear-equivalent params (first weight stored transposed so the
    # kernel computes x @ W; second weight kept as a (1, A) row).
    w1 = jax.random.normal(kw1, (H, A), dtype=jnp.float32) * (1.0 / jnp.sqrt(H))
    b1 = jax.random.normal(kb1, (1, A), dtype=jnp.float32) * 0.1
    w2_row = jax.random.normal(kw2, (1, A), dtype=jnp.float32) * (1.0 / jnp.sqrt(A))
    b2 = jax.random.normal(kb2, (1, 1), dtype=jnp.float32) * 0.1

    out = attn_forward(x, w1, b1, w2_row, b2)
    out = jax.block_until_ready(out)

    ref = attn_reference(x, w1, b1, w2_row, b2)
    assert out.shape == (B, S, 1)
    assert jnp.allclose(out, ref, atol=1e-4, rtol=1e-4)
    # softmax rows sum to 1
    assert jnp.allclose(jnp.sum(out[..., 0], axis=1), jnp.ones((B,)), atol=1e-4)

    print("KERNEL_OK")
</pallas_src>

<mosaic_0001>
module attributes {stable_mosaic.version = 11 : i64} {
  func.func @attn_kernel(%arg0: memref<16x32xf32, #tpu.memory_space<vmem>>, %arg1: memref<32x16xf32, #tpu.memory_space<vmem>>, %arg2: memref<1x16xf32, #tpu.memory_space<vmem>>, %arg3: memref<1x16xf32, #tpu.memory_space<vmem>>, %arg4: memref<2x8xf32, #tpu.memory_space<vmem>>) attributes {dimension_semantics = [], scalar_prefetch = 0 : i64, scratch_operands = 0 : i64, tpu.core_type = #tpu.core_type<tc>} {
    %c0 = arith.constant 0 : index
    %c0_0 = arith.constant 0 : index
    %0 = vector.load %arg0[%c0, %c0_0] : memref<16x32xf32, #tpu.memory_space<vmem>>, vector<16x32xf32>
    %c0_1 = arith.constant 0 : index
    %c0_2 = arith.constant 0 : index
    %1 = vector.load %arg1[%c0_1, %c0_2] : memref<32x16xf32, #tpu.memory_space<vmem>>, vector<32x16xf32>
    %cst = arith.constant dense<0.000000e+00> : vector<16x16xf32>
    %2 = tpu.matmul %0, %1, %cst {dimension_numbers = #tpu.dot_dimension_numbers<[1], [0], [0], [1], [0, 0, 1, 1], [], []>} : vector<16x32xf32>, vector<32x16xf32>, vector<16x16xf32> -> vector<16x16xf32>
    %c0_3 = arith.constant 0 : index
    %c0_4 = arith.constant 0 : index
    %3 = vector.load %arg2[%c0_3, %c0_4] : memref<1x16xf32, #tpu.memory_space<vmem>>, vector<1x16xf32>
    %4 = vector.broadcast %3 : vector<1x16xf32> to vector<16x16xf32>
    %5 = arith.addf %2, %4 : vector<16x16xf32>
    %cst_5 = arith.constant 0.000000e+00 : f32
    %6 = vector.broadcast %cst_5 : f32 to vector<16x16xf32>
    %7 = arith.maximumf %5, %6 : vector<16x16xf32>
    %8 = vector.shape_cast %7 : vector<16x16xf32> to vector<2x8x16xf32>
    %c0_6 = arith.constant 0 : index
    %c0_7 = arith.constant 0 : index
    %9 = vector.load %arg3[%c0_6, %c0_7] : memref<1x16xf32, #tpu.memory_space<vmem>>, vector<1x16xf32>
    %10 = vector.shape_cast %9 : vector<1x16xf32> to vector<1x1x16xf32>
    %11 = vector.broadcast %10 : vector<1x1x16xf32> to vector<2x8x16xf32>
    %12 = arith.mulf %8, %11 : vector<2x8x16xf32>
    %cst_8 = arith.constant dense<0.000000e+00> : vector<2x8xf32>
    %13 = vector.multi_reduction <add>, %12, %cst_8 [2] : vector<2x8x16xf32> to vector<2x8xf32>
    %cst_9 = arith.constant dense<0xFF800000> : vector<2xf32>
    %14 = vector.multi_reduction <maximumf>, %13, %cst_9 [1] : vector<2x8xf32> to vector<2xf32>
    %15 = vector.shape_cast %14 : vector<2xf32> to vector<2x1xf32>
    %16 = vector.broadcast %15 : vector<2x1xf32> to vector<2x8xf32>
    %17 = arith.subf %13, %16 : vector<2x8xf32>
    %18 = math.exp %17 : vector<2x8xf32>
    %cst_10 = arith.constant dense<0.000000e+00> : vector<2xf32>
    %19 = vector.multi_reduction <add>, %18, %cst_10 [1] : vector<2x8xf32> to vector<2xf32>
    %20 = vector.shape_cast %19 : vector<2xf32> to vector<2x1xf32>
    %21 = vector.broadcast %20 : vector<2x1xf32> to vector<2x8xf32>
    %22 = arith.divf %18, %21 : vector<2x8xf32>
    %c0_11 = arith.constant 0 : index
    %c0_12 = arith.constant 0 : index
    %23 = vector.load %arg4[%c0_11, %c0_12] : memref<2x8xf32, #tpu.memory_space<vmem>>, vector<2x8xf32>
    tpu.vector_store %arg4[%c0_11, %c0_12], %22 {strides = array<i32>} : memref<2x8xf32, #tpu.memory_space<vmem>>, vector<2x8xf32>,
    return
  }
}

</mosaic_0001>

<llo_original>
// kernel: tpu_custom_call.1
$region0: #{tpu_custom_call.1}
  #allocation0 [shape = 'u32[]', space=smem, size = 0x4, offset = 0x4, fixed_abs, tag = 'smem constant byte address 0x4 - core index']
  #allocation1 [shape = 'u32[144,128]{1,0:T(1,128)}', space=vmem, size = 0x12000, scoped, tag = 'internal scratch']
  %s0 = inlined_call_operand.vmem [shape: f32[16,32], index: 0, kind: input, shape index: {}]
  %s1 = inlined_call_operand.vmem [shape: f32[32,16], index: 1, kind: input, shape index: {}]
  %s2 = inlined_call_operand.vmem [shape: f32[1,16], index: 2, kind: input, shape index: {}]
  %s3 = inlined_call_operand.vmem [shape: f32[1,16], index: 3, kind: input, shape index: {}]
  %s4 = inlined_call_operand.hbm [shape: f32[2,8], index: 4, kind: output, shape index: {}]
  %s5 = sld [smem:[#allocation0]]
  $region26: #{tpu_custom_call.1} parent=0
    _
  %s7 = ssub.s32 1, %s5
  %s8 = scalar_select 0, %s7, %s5
  $region1: #{tpu_custom_call.1} parent=0
    #allocation2 [shape = 'u8[1024]{0}', space=vmem, size = 0x400, scoped, tag = 'output window, operand 0, single buffered']
    #allocation3 [shape = 's32[1]{0}', space=sflag, size = 0x4, scoped, tag = 'scoped memory for tpu_custom_call.1']
    %9 = vsyncpa [#allocation3], 0
    // Predicated region
    $region2: #{tpu_custom_call.1} parent=1 // pred_check
      _
    $region3: #{tpu_custom_call.1} parent=1 // pred_check_branch
      %11 = sbr.rel (0) target = $region5
    $region4: #{tpu_custom_call.1} parent=1 // pred_region
      _
    $region5: #{tpu_custom_call.1} parent=1 // pred_fallthru
      _
    // Predicated region
    $region6: #{tpu_custom_call.1} parent=1 // pred_check
      _
    $region7: #{tpu_custom_call.1} parent=1 // pred_check_branch
      %13 = sbr.rel (0) target = $region9
    $region8: #{tpu_custom_call.1} parent=1 // pred_region
      _
    $region9: #{tpu_custom_call.1} parent=1 // pred_fallthru
      _
    // Predicated region
    $region10: #{tpu_custom_call.1} parent=1 // pred_check
      _
    $region11: #{tpu_custom_call.1} parent=1 // pred_check_branch
      %15 = sbr.rel (0) target = $region13
    $region12: #{tpu_custom_call.1} parent=1 // pred_region
      _
    $region13: #{tpu_custom_call.1} parent=1 // pred_fallthru
      _
    // Predicated region
    $region14: #{tpu_custom_call.1} parent=1 // pred_check
      _
    $region15: #{tpu_custom_call.1} parent=1 // pred_check_branch
      %17 = sbr.rel (0) target = $region17
    $region16: #{tpu_custom_call.1} parent=1 // pred_region
      _
    $region17: #{tpu_custom_call.1} parent=1 // pred_fallthru
      _
    %v18 = vld [vmem:[%s0] sm:$0xff]
    %v19 = vld [vmem:[%s0 + $0x8] sm:$0xff]
    %v20 = vld [vmem:[%s1] sm:$0xff]
    %v21 = vld [vmem:[%s1 + $0x8] sm:$0xff]
    %v22 = vld [vmem:[%s1 + $0x10] sm:$0xff]
    %v23 = vld [vmem:[%s1 + $0x18] sm:$0xff]
    %v24 = vld [vmem:[%s2] sm:$0x1]
    %v26 = vlaneseq
    %v27 = vshrl.u32 %v26, 7
    %v28 = vsub.s32 0, %v27
    %v29 = vrot.slane %v24, %v28
    %vm31 = vcmask 261120
    %v33 = vsel %vm31, %v18, 0
    %v36 = vsel %vm31, %v19, 0
    %38 = vmatprep.subr.mxu0 0.0
    %39 = vmatpush1.msra.mxu0 %v20
    %40 = vmatprep.subr.mxu0 0.0
    %41 = vmatpush1.msra.mxu0 %v21
    %42 = vmatprep.subr.mxu0 0.0
    %43 = vmatpush1.msra.mxu0 %v22
    %44 = vmatprep.subr.mxu0 0.0
    %45 = vmatpush1.msra.mxu0 %v23
    %46 = vmatprep.subr.mxu0 0.0
    %47 = vmatpush1.msra.mxu0 0.0
    %48 = vmatprep.subr.mxu0 0.0
    %49 = vmatpush1.msra.mxu0 0.0
    %50 = vmatprep.subr.mxu0 0.0
    %51 = vmatpush1.msra.mxu0 0.0
    %52 = vmatprep.subr.mxu0 0.0
    %53 = vmatpush1.msra.mxu0 0.0
    %54 = vmatprep.subr.mxu0 0.0
    %55 = vmatpush1.msra.mxu0 0.0
    %56 = vmatprep.subr.mxu0 0.0
    %57 = vmatpush1.msra.mxu0 0.0
    %58 = vmatprep.subr.mxu0 0.0
    %59 = vmatpush1.msra.mxu0 0.0
    %60 = vmatprep.subr.mxu0 0.0
    %61 = vmatpush1.msra.mxu0 0.0
    %62 = vmatprep.subr.mxu0 0.0
    %63 = vmatpush1.msra.mxu0 0.0
    %64 = vmatprep.subr.mxu0 0.0
    %65 = vmatpush1.msra.mxu0 0.0
    %66 = vmatprep.subr.mxu0 0.0
    %67 = vmatpush1.msra.mxu0 0.0
    %68 = vmatprep.subr.mxu0 0.0
    %69 = vmatpush1.msra.mxu0 0.0
    %70 = vmatprep.subr.mxu0 0.0
    %71 = vmatpush1.msra.mxu0 0.0
    %72 = vmatprep.subr.mxu0 0.0
    %73 = vmatpush1.msra.mxu0 0.0
    %74 = vmatprep.subr.mxu0 0.0
    %75 = vmatpush1.msra.mxu0 0.0
    %76 = vmatprep.subr.mxu0 0.0
    %77 = vmatpush1.msra.mxu0 0.0
    %78 = vmatprep.subr.mxu0 0.0
    %79 = vmatpush1.msra.mxu0 0.0
    %80 = vmatprep.subr.mxu0 0.0
    %81 = vmatpush1.msra.mxu0 0.0
    %82 = vmatprep.subr.mxu0 0.0
    %83 = vmatpush1.msra.mxu0 0.0
    %84 = vmatprep.subr.mxu0 0.0
    %85 = vmatpush1.msra.mxu0 0.0
    %86 = vmatprep.subr.mxu0 0.0
    %87 = vmatpush1.msra.mxu0 0.0
    %88 = vmatprep.subr.mxu0 0.0
    %89 = vmatpush1.msra.mxu0 0.0
    %90 = vmatprep.subr.mxu0 0.0
    %91 = vmatpush1.msra.mxu0 0.0
    %92 = vmatprep.subr.mxu0 0.0
    %93 = vmatpush1.msra.mxu0 0.0
    %94 = vmatprep.subr.mxu0 0.0
    %95 = vmatpush1.msra.mxu0 0.0
    %96 = vmatprep.subr.mxu0 0.0
    %97 = vmatpush1.msra.mxu0 0.0
    %98 = vmatprep.subr.mxu0 0.0
    %99 = vmatpush1.msra.mxu0 0.0
    %100 = vmatprep.subr.mxu0 0.0
    %101 = vmatpush1.msra.mxu0 0.0
    %102 = vmatprep.mubr.f32.mxu0 0.0
    %103 = vmatmul.mubr.f32.gmra.mrb[0].mxu0 %v33
    %v104 = vpop.f32.mrb[0].mxu0
    %v105 = vadd.f32 %v29, %v104
    %v106 = vpop.f32.mrb[0].mxu0
    %107 = vmatprep.mubr.f32.mxu0 0.0
    %108 = vmatmul.mubr.f32.gmra.mrb[0].mxu0 %v36
    %v109 = vpop.f32.mrb[0].mxu0
    %v110 = vadd.f32 %v29, %v109
    %v111 = vpop.f32.mrb[0].mxu0
    %112 = vdwg.mxu0
    %v113 = vmax.f32 %v105, 0.0
    %v114 = vmax.f32 %v110, 0.0
    %v115 = vld [vmem:[%s3] sm:$0x1]
    %v117 = vlaneseq
    %v118 = vshrl.u32 %v117, 7
    %v119 = vsub.s32 0, %v118
    %v120 = vrot.slane %v115, %v119
    %v122 = vmul.f32 %v113, %v120
    %v123 = vmul.f32 %v114, %v120
    %vm124 = vcmask 130048
    %v125 = vsel %vm124, %v122, 0.0
    %126 = vadd.xlane.f32.xlu0 %v125
    %v127 = vpop.xlane.xlu0 %126
    %v128 = vsel %vm124, %v123, 0.0
    %129 = vadd.xlane.f32.xlu0 %v128
    %v130 = vpop.xlane.xlu0 %129
    %v133 = vlaneseq
    %v134 = vand.u32 %v133, 127
    %v135 = vlaneseq
    %v136 = vshrl.u32 %v135, 7
    %v137 = vsub.s32 %v134, %v136
    %v138 = vrot.slane %v127, %v137
    %v139 = vlaneseq
    %v140 = vshrl.u32 %v139, 7
    %v141 = vsub.s32 %v134, %v140
    %v142 = vrot.slane %v130, %v141
    %vm143 = vcmask 1041409
    %v144 = vsel %vm143, %v142, %v138
    %vm146 = vcmask 58368
    %v147 = vsel %vm146, %v144, -inf
    %148 = vmax.xlane.f32.xlu0 %v147
    %v149 = vpop.xlane.xlu0 %148
    %v151 = vlaneseq
    %v152 = vshrl.u32 %v151, 7
    %v153 = vsub.s32 0, %v152
    %v154 = vrot.slane %v149, %v153
    %v155 = vlaneseq
    %v156 = vshrl.u32 %v155, 7
    %v157 = vsub.s32 1, %v156
    %v158 = vrot.slane %v149, %v157
    %v161 = vsub.f32 %v127, %v154
    %v162 = vsub.f32 %v130, %v158
    %v163 = vmul.f32 %v161, 1.442695
    %v164 = vpow.pop %v163
    %v165 = vmul.f32 %v162, 1.442695
    %v166 = vpow.pop %v165
    %169 = vset.pattern.permute.xlu0 0
    %170 = vperm.xlu0 %169, %v164
    %v171 = vpop.permute.xlu0 %170
    %172 = vset.pattern.permute.xlu0 0
    %173 = vperm.xlu0 %172, %v166
    %v174 = vpop.permute.xlu0 %173
    %v175 = vlaneseq
    %v176 = vshrl.u32 %v175, 7
    %v177 = vsub.s32 %v134, %v176
    %v178 = vrot.slane %v171, %v177
    %v179 = vlaneseq
    %v180 = vshrl.u32 %v179, 7
    %v181 = vsub.s32 %v134, %v180
    %v182 = vrot.slane %v174, %v181
    %v183 = vsel %vm143, %v182, %v178
    %v185 = vsel %vm146, %v183, 0.0
    %186 = vadd.xlane.f32.xlu0 %v185
    %v187 = vpop.xlane.xlu0 %186
    %v189 = vlaneseq
    %v190 = vshrl.u32 %v189, 7
    %v191 = vsub.s32 0, %v190
    %v192 = vrot.slane %v187, %v191
    %v193 = vlaneseq
    %v194 = vshrl.u32 %v193, 7
    %v195 = vsub.s32 1, %v194
    %v196 = vrot.slane %v187, %v195
    %v199 = vrcp.pop %v192
    %v200 = vmul.f32 %v164, %v199
    %v201 = vrcp.pop %v196
    %v202 = vmul.f32 %v166, %v201
    %205 = vset.pattern.permute.xlu0 0
    %206 = vperm.xlu0 %205, %v200
    %v207 = vpop.permute.xlu0 %206
    %208 = vset.pattern.permute.xlu0 0
    %209 = vperm.xlu0 %208, %v202
    %v210 = vpop.permute.xlu0 %209
    %v211 = vlaneseq
    %v212 = vshrl.u32 %v211, 7
    %v213 = vsub.s32 %v134, %v212
    %v214 = vrot.slane %v207, %v213
    %v215 = vlaneseq
    %v216 = vshrl.u32 %v215, 7
    %v217 = vsub.s32 %v134, %v216
    %v218 = vrot.slane %v210, %v217
    %v219 = vsel %vm143, %v218, %v214
    %221 = vst.msk [vmem:[#allocation2] sm:$0x3] %vm146, %v219
    // Predicated region
    $region18: #{tpu_custom_call.1} parent=1 // pred_check
      _
    $region19: #{tpu_custom_call.1} parent=1 // pred_check_branch
      %223 = sbr.rel (0) target = $region21
    $region20: #{tpu_custom_call.1} parent=1 // pred_region
      %s225 = ssub.s32 32, 32
      %226 = vsyncadd [#allocation3], %s225
      %s228 = sshll.u32 [#allocation2], 4
      %s229 = int_to_ptr.vmem [resolvable:$true] %s228
      %231 = dma.vmem_to_hbm [thread:$0]  %s229, 32, %s4, [#allocation3]
    $region21: #{tpu_custom_call.1} parent=1 // pred_fallthru
      _
    // Predicated region
    $region22: #{tpu_custom_call.1} parent=1 // pred_check
      _
    $region23: #{tpu_custom_call.1} parent=1 // pred_check_branch
      %233 = sbr.rel (0) target = $region25
    $region24: #{tpu_custom_call.1} parent=1 // pred_region
      %234 = dma.done [#allocation3], 32
    $region25: #{tpu_custom_call.1} parent=1 // pred_fallthru
      _
    %235 = vsyncpa [#allocation3], 1

</llo_original>
